<compile_context>
chip_gen: v7x
topology: tpu7x:2x2x1
jax: 0.10.0
libtpu: 0.0.40
codegen_flags: <defaults>
</compile_context>

<pallas_src>
import functools
import math

import jax
import jax.numpy as jnp
from jax.experimental import pallas as pl
from jax.experimental.pallas import tpu as pltpu


# --------------------------------------------------------------------------- #
# small integer helpers (wrapper-side, Python ints)
# --------------------------------------------------------------------------- #
def _cdiv(a, b):
    return -(-a // b)


def _round_up(n, m):
    return _cdiv(n, m) * m


# --------------------------------------------------------------------------- #
# kernels
# --------------------------------------------------------------------------- #
def _ln_kernel_rowwise(x_ref, w_ref, b_ref, o_ref, *, eps, inv_n):
    """hidden is the full lane (last) axis of the block: plain per-row reduce."""
    x = x_ref[...].astype(jnp.float32)
    mean = jnp.sum(x, axis=-1, keepdims=True) * inv_n
    xc = x - mean
    # centered (two-pass) variance: no cancellation when |mean| >> std
    var = jnp.sum(xc * xc, axis=-1, keepdims=True) * inv_n
    y = xc * jax.lax.rsqrt(var + eps)
    y = y * w_ref[...].astype(jnp.float32) + b_ref[...].astype(jnp.float32)
    o_ref[...] = y.astype(o_ref.dtype)


def _ln_kernel_packed(x_ref, w_ref, b_ref, seg_ref, o_ref, *, eps, inv_n, residual):
    """`pack` logical rows are packed along the 128-wide lane axis of each row.

    Per-logical-row (segment) sums use a block-diagonal (lane, lane) 0/1 bf16
    matmul on the MXU: dot(x, seg) both reduces within each segment *and*
    broadcasts the result back to every lane of that segment, so the whole
    kernel stays in a lane-dense (rows, 128) layout (no sub-(8,128) reshapes,
    no masked stores).  The operand is split into a bf16 hi part plus a bf16
    residual so the sums are accurate enough for f32 inputs with exactly one
    MXU pass per dot; for bf16 inputs (residual=False statically) the hi part
    is exact and the residual dot is skipped.
    """
    x = x_ref[...].astype(jnp.float32)
    seg = seg_ref[...]  # (lane, lane) block-diagonal 0/1, bf16

    def seg_sum(v):
        hi = v.astype(jnp.bfloat16)  # native bf16 MXU operand
        s = jnp.dot(hi, seg, preferred_element_type=jnp.float32)
        if residual:  # static flag
            lo = (v - hi.astype(jnp.float32)).astype(jnp.bfloat16)
            s = s + jnp.dot(lo, seg, preferred_element_type=jnp.float32)
        return s

    mean = seg_sum(x) * inv_n          # already broadcast back to every lane
    xc = x - mean
    var = seg_sum(xc * xc) * inv_n     # centered variance
    y = xc * jax.lax.rsqrt(var + eps)
    y = y * w_ref[...].astype(jnp.float32) + b_ref[...].astype(jnp.float32)
    o_ref[...] = y.astype(o_ref.dtype)


# --------------------------------------------------------------------------- #
# wrapper
# --------------------------------------------------------------------------- #
def _tpu_vmem_config():
    """Generation-aware scoped-VMEM limit and 2-TC hint (v7x)."""
    default_cap = 64 * 1024 * 1024
    try:
        info = pltpu.get_tpu_info()
        vmem_cap = int(getattr(info, "vmem_capacity_bytes", default_cap))
    except Exception:
        vmem_cap = default_cap
    two_tc = vmem_cap < 96 * 1024 * 1024            # 64 MiB part == v7x (2 TCs)
    vmem_limit = 32 * 1024 * 1024 if two_tc else 64 * 1024 * 1024
    return vmem_limit, two_tc


def _choose_tile_rows(n_rows, lane, dtype_bytes, sublane, vmem_limit, two_tc,
                      max_tile_rows=8192):
    """Row-tile size from a VMEM budget + a per-step HBM-bytes floor."""
    # per block row: in + out tiles double-buffered, plus ~6 f32 tile-sized
    # temporaries for the in-kernel compute (conservative; compiler reuses).
    vmem_per_row = lane * (2 * 2 * dtype_bytes + 6 * 4)
    budget = (vmem_limit * 3) // 4                      # headroom for seg/w/b/etc.
    tile = max(sublane, min(max_tile_rows, budget // vmem_per_row))
    tile = max(sublane, (tile // sublane) * sublane)

    io_per_row = lane * dtype_bytes * 2                 # in + out HBM bytes / row
    # never push a grid step below ~2 MiB of HBM traffic (roofline plateau)
    min_rows = max(sublane, _round_up(_cdiv(2 * 1024 * 1024, io_per_row), sublane))
    target_steps = 4 if two_tc else 3                   # pipeline / feed both TCs

    if n_rows < target_steps * min_rows:
        # Too small to split profitably: fewest steps possible.
        if n_rows <= tile:
            return n_rows            # single full-extent block, no divisibility pad
    elif _cdiv(n_rows, tile) < target_steps:
        tile = max(min_rows, _round_up(_cdiv(n_rows, target_steps), sublane))

    if two_tc:
        # v7x: ("parallel",) shards the grid axis across 2 TCs -> prefer an even
        # step count when it doesn't drop per-step bytes below the floor.
        steps = _cdiv(n_rows, tile)
        if steps > 1 and steps % 2 == 1:
            alt = _round_up(_cdiv(n_rows, steps + 1), sublane)
            if alt >= min_rows:
                tile = alt
    return tile


def layer_norm(x, weight, bias, *, eps=1e-12):
    """LayerNorm over the last axis of x. weight/bias shape: (hidden,)."""
    orig_shape = x.shape
    hidden = orig_shape[-1]
    rows = math.prod(orig_shape[:-1]) if len(orig_shape) > 1 else 1
    x2 = x.reshape(rows, hidden)

    dtype_bytes = jnp.dtype(x.dtype).itemsize
    sublane = max(8, 32 // dtype_bytes)                 # 8 f32 / 16 bf16 / 32 int8
    vmem_limit, two_tc = _tpu_vmem_config()
    compiler_params = pltpu.CompilerParams(
        dimension_semantics=("parallel",),
        vmem_limit_bytes=vmem_limit,
    )
    inv_n = 1.0 / float(hidden)

    # ---- lane-packed path: hidden divides 128 (config hidden_dim=32) --------
    pack = 128 // hidden if (hidden < 128 and 128 % hidden == 0) else 1
    if pack > 1:
        pad_rows = _round_up(rows, pack)
        if pad_rows != rows:
            # At most (pack-1) extra rows, and only when the leading dims don't
            # divide `pack` (they do for the usual batch*seq shapes).
            x2 = jnp.pad(x2, ((0, pad_rows - rows), (0, 0)))
        packed_rows = pad_rows // pack
        lane = hidden * pack                             # == 128: lane-dense
        xp = x2.reshape(packed_rows, lane)               # free contiguous reshape

        w_lane = jnp.tile(weight.reshape(-1), pack).reshape(1, lane)
        b_lane = jnp.tile(bias.reshape(-1), pack).reshape(1, lane)
        # Block-diagonal 0/1 segment matrix in bf16 (exact); constant index_map
        # -> DMA'd once and held resident in VMEM.
        idx = jnp.arange(lane) // hidden
        seg = (idx[:, None] == idx[None, :]).astype(jnp.bfloat16)

        tile_rows = _choose_tile_rows(packed_rows, lane, dtype_bytes, sublane,
                                      vmem_limit, two_tc)
        grid = (_cdiv(packed_rows, tile_rows),)
        kernel = functools.partial(
            _ln_kernel_packed, eps=float(eps), inv_n=inv_n,
            residual=(x.dtype != jnp.bfloat16),          # bf16 input: hi is exact
        )
        out = pl.pallas_call(
            kernel,
            out_shape=jax.ShapeDtypeStruct((packed_rows, lane), x.dtype),
            grid_spec=pltpu.PrefetchScalarGridSpec(
                num_scalar_prefetch=0,
                grid=grid,
                in_specs=[
                    pl.BlockSpec((tile_rows, lane), lambda i: (i, 0)),
                    pl.BlockSpec((1, lane), lambda i: (0, 0)),
                    pl.BlockSpec((1, lane), lambda i: (0, 0)),
                    pl.BlockSpec((lane, lane), lambda i: (0, 0)),
                ],
                out_specs=pl.BlockSpec((tile_rows, lane), lambda i: (i, 0)),
            ),
            compiler_params=compiler_params,
        )(xp, w_lane, b_lane, seg)

        out = out.reshape(pad_rows, hidden)
        if pad_rows != rows:
            out = out[:rows]
        return out.reshape(orig_shape)

    # ---- row-wise path: hidden is the full lane axis of each block ----------
    # TODO(synk): for hidden that is neither a multiple nor a divisor of 128
    # (e.g. 96, 200), a lane-padded block (round_up(hidden,128)) with masked
    # reductions would avoid masked vst partial stores; kept full-extent here.
    lane = hidden
    w_lane = weight.reshape(1, lane)
    b_lane = bias.reshape(1, lane)

    tile_rows = _choose_tile_rows(rows, lane, dtype_bytes, sublane,
                                  vmem_limit, two_tc)
    grid = (_cdiv(rows, tile_rows),)
    kernel = functools.partial(_ln_kernel_rowwise, eps=float(eps), inv_n=inv_n)
    out = pl.pallas_call(
        kernel,
        out_shape=jax.ShapeDtypeStruct((rows, hidden), x.dtype),
        grid_spec=pltpu.PrefetchScalarGridSpec(
            num_scalar_prefetch=0,
            grid=grid,
            in_specs=[
                pl.BlockSpec((tile_rows, lane), lambda i: (i, 0)),
                pl.BlockSpec((1, lane), lambda i: (0, 0)),
                pl.BlockSpec((1, lane), lambda i: (0, 0)),
            ],
            out_specs=pl.BlockSpec((tile_rows, lane), lambda i: (i, 0)),
        ),
        compiler_params=compiler_params,
    )(x2, w_lane, b_lane)
    return out.reshape(orig_shape)


# --------------------------------------------------------------------------- #
# reference + self-test
# --------------------------------------------------------------------------- #
def _reference_layer_norm(x, weight, bias, eps):
    mean = jnp.mean(x, axis=-1, keepdims=True)
    var = jnp.mean((x - mean) ** 2, axis=-1, keepdims=True)
    return (x - mean) / jnp.sqrt(var + eps) * weight + bias


if __name__ == "__main__":
    # Config-implied shapes: hidden_dim=32, layer_norm_eps=1e-12.
    eps = 1e-12
    key = jax.random.PRNGKey(0)
    kx, kw, kb, k2 = jax.random.split(key, 4)

    # Case 1: hidden_dim = 32 (divides 128) -> lane-packed MXU path.
    batch, seq, hidden = 2, 8, 32
    x = jax.random.normal(kx, (batch, seq, hidden), dtype=jnp.float32)
    weight = 1.0 + 0.1 * jax.random.normal(kw, (hidden,), dtype=jnp.float32)
    bias = 0.1 * jax.random.normal(kb, (hidden,), dtype=jnp.float32)

    y = jax.block_until_ready(layer_norm(x, weight, bias, eps=eps))
    ref = _reference_layer_norm(x, weight, bias, eps)
    assert jnp.allclose(y, ref, atol=1e-5, rtol=1e-5), "packed-path mismatch vs reference"

    # Case 2: wider hidden (multiple of 128) with a ragged row count (15 rows)
    # -> row-wise path, single full-extent block, no wrapper pad/slice.
    hidden2 = 256
    x2 = jax.random.normal(k2, (3, 5, hidden2), dtype=jnp.float32)
    w2 = 1.0 + 0.05 * jnp.arange(hidden2, dtype=jnp.float32) / hidden2
    b2 = jnp.full((hidden2,), 0.25, dtype=jnp.float32)
    y2 = jax.block_until_ready(layer_norm(x2, w2, b2, eps=eps))
    ref2 = _reference_layer_norm(x2, w2, b2, eps)
    assert jnp.allclose(y2, ref2, atol=1e-5, rtol=1e-5), "row-wise-path mismatch vs reference"

    print("KERNEL_OK")
</pallas_src>

<mosaic_0001>
module attributes {stable_mosaic.version = 11 : i64} {
  func.func @_ln_kernel_packed(%arg0: i32, %arg1: memref<4x128xf32, #tpu.memory_space<vmem>>, %arg2: memref<1x128xf32, #tpu.memory_space<vmem>>, %arg3: memref<1x128xf32, #tpu.memory_space<vmem>>, %arg4: memref<128x128xbf16, #tpu.memory_space<vmem>>, %arg5: memref<4x128xf32, #tpu.memory_space<vmem>>) attributes {dimension_semantics = [#tpu.dimension_semantics<parallel>], iteration_bounds = array<i64: 1>, scalar_prefetch = 0 : i64, scratch_operands = 0 : i64, tpu.core_type = #tpu.core_type<tc>, window_params = [{transform_indices = @transform_0, window_bounds = array<i64: 4, 128>}, {pipeline_mode = #tpu.pipeline_mode<synchronous>, transform_indices = @transform_1, window_bounds = array<i64: 1, 128>}, {pipeline_mode = #tpu.pipeline_mode<synchronous>, transform_indices = @transform_2, window_bounds = array<i64: 1, 128>}, {pipeline_mode = #tpu.pipeline_mode<synchronous>, transform_indices = @transform_3, window_bounds = array<i64: 128, 128>}, {transform_indices = @transform_4, window_bounds = array<i64: 4, 128>}]} {
    %c0 = arith.constant 0 : index
    %c0_0 = arith.constant 0 : index
    %0 = vector.load %arg1[%c0, %c0_0] : memref<4x128xf32, #tpu.memory_space<vmem>>, vector<4x128xf32>
    %c0_1 = arith.constant 0 : index
    %c0_2 = arith.constant 0 : index
    %1 = vector.load %arg4[%c0_1, %c0_2] : memref<128x128xbf16, #tpu.memory_space<vmem>>, vector<128x128xbf16>
    %2 = arith.truncf %0 : vector<4x128xf32> to vector<4x128xbf16>
    %cst = arith.constant dense<0.000000e+00> : vector<4x128xf32>
    %3 = tpu.matmul %2, %1, %cst {dimension_numbers = #tpu.dot_dimension_numbers<[1], [0], [0], [1], [0, 0, 1, 1], [], []>} : vector<4x128xbf16>, vector<128x128xbf16>, vector<4x128xf32> -> vector<4x128xf32>
    %4 = arith.extf %2 : vector<4x128xbf16> to vector<4x128xf32>
    %5 = arith.subf %0, %4 : vector<4x128xf32>
    %6 = arith.truncf %5 : vector<4x128xf32> to vector<4x128xbf16>
    %cst_3 = arith.constant dense<0.000000e+00> : vector<4x128xf32>
    %7 = tpu.matmul %6, %1, %cst_3 {dimension_numbers = #tpu.dot_dimension_numbers<[1], [0], [0], [1], [0, 0, 1, 1], [], []>} : vector<4x128xbf16>, vector<128x128xbf16>, vector<4x128xf32> -> vector<4x128xf32>
    %8 = arith.addf %3, %7 : vector<4x128xf32>
    %cst_4 = arith.constant 3.125000e-02 : f32
    %9 = vector.broadcast %cst_4 : f32 to vector<4x128xf32>
    %10 = arith.mulf %8, %9 : vector<4x128xf32>
    %11 = arith.subf %0, %10 : vector<4x128xf32>
    %12 = arith.mulf %11, %11 : vector<4x128xf32>
    %13 = arith.truncf %12 : vector<4x128xf32> to vector<4x128xbf16>
    %cst_5 = arith.constant dense<0.000000e+00> : vector<4x128xf32>
    %14 = tpu.matmul %13, %1, %cst_5 {dimension_numbers = #tpu.dot_dimension_numbers<[1], [0], [0], [1], [0, 0, 1, 1], [], []>} : vector<4x128xbf16>, vector<128x128xbf16>, vector<4x128xf32> -> vector<4x128xf32>
    %15 = arith.extf %13 : vector<4x128xbf16> to vector<4x128xf32>
    %16 = arith.subf %12, %15 : vector<4x128xf32>
    %17 = arith.truncf %16 : vector<4x128xf32> to vector<4x128xbf16>
    %cst_6 = arith.constant dense<0.000000e+00> : vector<4x128xf32>
    %18 = tpu.matmul %17, %1, %cst_6 {dimension_numbers = #tpu.dot_dimension_numbers<[1], [0], [0], [1], [0, 0, 1, 1], [], []>} : vector<4x128xbf16>, vector<128x128xbf16>, vector<4x128xf32> -> vector<4x128xf32>
    %19 = arith.addf %14, %18 : vector<4x128xf32>
    %cst_7 = arith.constant 3.125000e-02 : f32
    %20 = vector.broadcast %cst_7 : f32 to vector<4x128xf32>
    %21 = arith.mulf %19, %20 : vector<4x128xf32>
    %cst_8 = arith.constant 9.99999996E-13 : f32
    %22 = vector.broadcast %cst_8 : f32 to vector<4x128xf32>
    %23 = arith.addf %21, %22 : vector<4x128xf32>
    %24 = math.rsqrt %23 : vector<4x128xf32>
    %25 = arith.mulf %11, %24 : vector<4x128xf32>
    %c0_9 = arith.constant 0 : index
    %c0_10 = arith.constant 0 : index
    %26 = vector.load %arg2[%c0_9, %c0_10] : memref<1x128xf32, #tpu.memory_space<vmem>>, vector<1x128xf32>
    %27 = vector.broadcast %26 : vector<1x128xf32> to vector<4x128xf32>
    %28 = arith.mulf %25, %27 : vector<4x128xf32>
    %c0_11 = arith.constant 0 : index
    %c0_12 = arith.constant 0 : index
    %29 = vector.load %arg3[%c0_11, %c0_12] : memref<1x128xf32, #tpu.memory_space<vmem>>, vector<1x128xf32>
    %30 = vector.broadcast %29 : vector<1x128xf32> to vector<4x128xf32>
    %31 = arith.addf %28, %30 : vector<4x128xf32>
    %c0_13 = arith.constant 0 : index
    %c0_14 = arith.constant 0 : index
    %32 = vector.load %arg5[%c0_13, %c0_14] : memref<4x128xf32, #tpu.memory_space<vmem>>, vector<4x128xf32>
    tpu.vector_store %arg5[%c0_13, %c0_14], %31 {strides = array<i32>} : memref<4x128xf32, #tpu.memory_space<vmem>>, vector<4x128xf32>,
    return
  }
  func.func @transform_0(%arg0: i32) -> (i32, i32) {
    %c0_i32 = arith.constant 0 : i32
    %c0_i32_0 = arith.constant 0 : i32
    return %arg0, %c0_i32 : i32, i32
  }
  func.func @transform_1(%arg0: i32) -> (i32, i32) {
    %c0_i32 = arith.constant 0 : i32
    %c0_i32_0 = arith.constant 0 : i32
    %c0_i32_1 = arith.constant 0 : i32
    return %c0_i32, %c0_i32_0 : i32, i32
  }
  func.func @transform_2(%arg0: i32) -> (i32, i32) {
    %c0_i32 = arith.constant 0 : i32
    %c0_i32_0 = arith.constant 0 : i32
    %c0_i32_1 = arith.constant 0 : i32
    return %c0_i32, %c0_i32_0 : i32, i32
  }
  func.func @transform_3(%arg0: i32) -> (i32, i32) {
    %c0_i32 = arith.constant 0 : i32
    %c0_i32_0 = arith.constant 0 : i32
    %c0_i32_1 = arith.constant 0 : i32
    return %c0_i32, %c0_i32_0 : i32, i32
  }
  func.func @transform_4(%arg0: i32) -> (i32, i32) {
    %c0_i32 = arith.constant 0 : i32
    %c0_i32_0 = arith.constant 0 : i32
    return %arg0, %c0_i32 : i32, i32
  }
}

</mosaic_0001>

<llo_original>
// kernel: tpu_custom_call.1
$region0: #{tpu_custom_call.1}
  #allocation0 [shape = 'u32[]', space=smem, size = 0x4, offset = 0x4, fixed_abs, tag = 'smem constant byte address 0x4 - core index']
  #allocation1 [shape = 'u32[144,128]{1,0:T(1,128)}', space=vmem, size = 0x12000, scoped, tag = 'internal scratch']
  %s0 = inlined_call_operand.hbm [shape: f32[4,128], index: 0, kind: input, shape index: {}]
  %s1 = inlined_call_operand.vmem [shape: f32[1,128], index: 1, kind: input, shape index: {}]
  %s2 = inlined_call_operand.vmem [shape: f32[1,128], index: 2, kind: input, shape index: {}]
  %s3 = inlined_call_operand.hbm [shape: bf16[128,128], index: 3, kind: input, shape index: {}]
  %s4 = inlined_call_operand.hbm [shape: f32[4,128], index: 4, kind: output, shape index: {}]
  %s5 = sld [smem:[#allocation0]]
  $region34: #{tpu_custom_call.1} parent=0
    _
  %s7 = ssub.s32 1, %s5
  %s8 = scalar_select 0, %s7, %s5
  $region1: #{tpu_custom_call.1} parent=0
    #allocation2 [shape = 'u8[2048]{0}', space=vmem, size = 0x800, scoped, tag = 'input window, operand 0, single buffered']
    #allocation3 [shape = 's32[1]{0}', space=sflag, size = 0x4, scoped, tag = 'scoped memory for tpu_custom_call.1']
    #allocation4 [shape = 's32[1]{0}', space=sflag, size = 0x4, scoped, tag = 'scoped memory for tpu_custom_call.1']
    #allocation5 [shape = 'u8[32768]{0}', space=vmem, size = 0x8000, scoped, tag = 'input window, operand 3, single buffered']
    #allocation6 [shape = 's32[1]{0}', space=sflag, size = 0x4, scoped, tag = 'scoped memory for tpu_custom_call.1']
    #allocation7 [shape = 'u8[2048]{0}', space=vmem, size = 0x800, scoped, tag = 'output window, operand 0, single buffered']
    %9 = vsyncpa [#allocation3], 0
    %10 = vsyncpa [#allocation6], 0
    %11 = vsyncpa [#allocation4], 0
    // Predicated region
    $region2: #{tpu_custom_call.1} parent=1 // pred_check
      _
    $region3: #{tpu_custom_call.1} parent=1 // pred_check_branch
      %13 = sbr.rel (0) target = $region5
    $region4: #{tpu_custom_call.1} parent=1 // pred_region
      %s15 = ssub.s32 64, 64
      %16 = vsyncadd [#allocation3], %s15
      %s18 = sshll.u32 [#allocation2], 4
      %s19 = int_to_ptr.vmem [resolvable:$true] %s18
      %21 = dma.hbm_to_vmem [thread:$0]  %s0, 64, %s19, [#allocation3]
    $region5: #{tpu_custom_call.1} parent=1 // pred_fallthru
      _
    // Predicated region
    $region6: #{tpu_custom_call.1} parent=1 // pred_check
      _
    $region7: #{tpu_custom_call.1} parent=1 // pred_check_branch
      %23 = sbr.rel (0) target = $region9
    $region8: #{tpu_custom_call.1} parent=1 // pred_region
      _
    $region9: #{tpu_custom_call.1} parent=1 // pred_fallthru
      _
    // Predicated region
    $region10: #{tpu_custom_call.1} parent=1 // pred_check
      _
    $region11: #{tpu_custom_call.1} parent=1 // pred_check_branch
      %25 = sbr.rel (0) target = $region13
    $region12: #{tpu_custom_call.1} parent=1 // pred_region
      _
    $region13: #{tpu_custom_call.1} parent=1 // pred_fallthru
      _
    // Predicated region
    $region14: #{tpu_custom_call.1} parent=1 // pred_check
      _
    $region15: #{tpu_custom_call.1} parent=1 // pred_check_branch
      %27 = sbr.rel (0) target = $region17
    $region16: #{tpu_custom_call.1} parent=1 // pred_region
      %s29 = ssub.s32 1024, 1024
      %30 = vsyncadd [#allocation6], %s29
      %s31 = sshll.u32 [#allocation5], 4
      %s32 = int_to_ptr.vmem [resolvable:$true] %s31
      %37 = dma.hbm_to_vmem [thread:$0]  %s3, 1024, %s32, [#allocation6], 64, 64, 4
    $region17: #{tpu_custom_call.1} parent=1 // pred_fallthru
      _
    // Predicated region
    $region18: #{tpu_custom_call.1} parent=1 // pred_check
      _
    $region19: #{tpu_custom_call.1} parent=1 // pred_check_branch
      %39 = sbr.rel (0) target = $region21
    $region20: #{tpu_custom_call.1} parent=1 // pred_region
      %40 = dma.done [#allocation3], 64
    $region21: #{tpu_custom_call.1} parent=1 // pred_fallthru
      _
    // Predicated region
    $region22: #{tpu_custom_call.1} parent=1 // pred_check
      _
    $region23: #{tpu_custom_call.1} parent=1 // pred_check_branch
      %42 = sbr.rel (0) target = $region25
    $region24: #{tpu_custom_call.1} parent=1 // pred_region
      %43 = dma.done [#allocation6], 1024
    $region25: #{tpu_custom_call.1} parent=1 // pred_fallthru
      _
    %v45 = vld [vmem:[#allocation2] sm:$0xf]
    %v46 = vld [vmem:[#allocation5] sm:$0xf]
    %v47 = vld [vmem:[#allocation5 + $0x4] sm:$0xf]
    %v48 = vld [vmem:[#allocation5 + $0x8] sm:$0xf]
    %v49 = vld [vmem:[#allocation5 + $0xc] sm:$0xf]
    %v50 = vld [vmem:[#allocation5 + $0x10] sm:$0xf]
    %v51 = vld [vmem:[#allocation5 + $0x14] sm:$0xf]
    %v52 = vld [vmem:[#allocation5 + $0x18] sm:$0xf]
    %v53 = vld [vmem:[#allocation5 + $0x1c] sm:$0xf]
    %v54 = vld [vmem:[#allocation5 + $0x20] sm:$0xf]
    %v55 = vld [vmem:[#allocation5 + $0x24] sm:$0xf]
    %v56 = vld [vmem:[#allocation5 + $0x28] sm:$0xf]
    %v57 = vld [vmem:[#allocation5 + $0x2c] sm:$0xf]
    %v58 = vld [vmem:[#allocation5 + $0x30] sm:$0xf]
    %v59 = vld [vmem:[#allocation5 + $0x34] sm:$0xf]
    %v60 = vld [vmem:[#allocation5 + $0x38] sm:$0xf]
    %v61 = vld [vmem:[#allocation5 + $0x3c] sm:$0xf]
    %v62 = vpack.c.bf16 %v45, %v45
    %v63 = vunpack.c.l.bf16 %v62
    %v64 = vsub.f32 %v45, %v63
    %v65 = vpack.c.bf16 %v64, %v64
    %v82 = vunpack.c.l.b16 %v46
    %v83 = vunpack.c.l.b16 %v47
    %v84 = vunpack.c.l.b16 %v48
    %v85 = vunpack.c.l.b16 %v49
    %v86 = vunpack.c.l.b16 %v50
    %v87 = vunpack.c.l.b16 %v51
    %v88 = vunpack.c.l.b16 %v52
    %v89 = vunpack.c.l.b16 %v53
    %v90 = vunpack.c.l.b16 %v54
    %v91 = vunpack.c.l.b16 %v55
    %v92 = vunpack.c.l.b16 %v56
    %v93 = vunpack.c.l.b16 %v57
    %v94 = vunpack.c.l.b16 %v58
    %v95 = vunpack.c.l.b16 %v59
    %v96 = vunpack.c.l.b16 %v60
    %v97 = vunpack.c.l.b16 %v61
    %v98 = vpack.c.b16 %v83, %v82
    %v99 = vpack.c.b16 %v85, %v84
    %v100 = vpack.c.b16 %v87, %v86
    %v101 = vpack.c.b16 %v89, %v88
    %v102 = vpack.c.b16 %v91, %v90
    %v103 = vpack.c.b16 %v93, %v92
    %v104 = vpack.c.b16 %v95, %v94
    %v105 = vpack.c.b16 %v97, %v96
    %114 = vmatprep.subr.bf16.mxu0 0
    %115 = vmatpush1.bf16.msra.mxu0 %v98
    %116 = vmatprep.subr.bf16.mxu0 0
    %117 = vmatpush1.bf16.msra.mxu0 %v99
    %118 = vmatprep.subr.bf16.mxu0 0
    %119 = vmatpush1.bf16.msra.mxu0 %v100
    %120 = vmatprep.subr.bf16.mxu0 0
    %121 = vmatpush1.bf16.msra.mxu0 %v101
    %122 = vmatprep.subr.bf16.mxu0 0
    %123 = vmatpush1.bf16.msra.mxu0 %v102
    %124 = vmatprep.subr.bf16.mxu0 0
    %125 = vmatpush1.bf16.msra.mxu0 %v103
    %126 = vmatprep.subr.bf16.mxu0 0
    %127 = vmatpush1.bf16.msra.mxu0 %v104
    %128 = vmatprep.subr.bf16.mxu0 0
    %129 = vmatpush1.bf16.msra.mxu0 %v105
    %130 = vmatprep.subr.bf16.mxu0 0
    %131 = vmatpush1.bf16.msra.mxu0 0
    %132 = vmatprep.subr.bf16.mxu0 0
    %133 = vmatpush1.bf16.msra.mxu0 0
    %134 = vmatprep.subr.bf16.mxu0 0
    %135 = vmatpush1.bf16.msra.mxu0 0
    %136 = vmatprep.subr.bf16.mxu0 0
    %137 = vmatpush1.bf16.msra.mxu0 0
    %138 = vmatprep.subr.bf16.mxu0 0
    %139 = vmatpush1.bf16.msra.mxu0 0
    %140 = vmatprep.subr.bf16.mxu0 0
    %141 = vmatpush1.bf16.msra.mxu0 0
    %142 = vmatprep.subr.bf16.mxu0 0
    %143 = vmatpush1.bf16.msra.mxu0 0
    %144 = vmatprep.subr.bf16.mxu0 0
    %145 = vmatpush1.bf16.msra.mxu0 0
    %146 = vmatprep.mubr.bf16.mxu0 0
    %147 = vmatmul.mubr.bf16.gmra.mrb[0].mxu0 %v65
    %v148 = vpop.f32.mrb[0].mxu0
    %v149 = vadd.f32 0.0, %v148
    %v150 = vpop.f32.mrb[0].mxu0
    %v151 = vpop.f32.mrb[0].mxu0
    %v152 = vpop.f32.mrb[0].mxu0
    %153 = vdwg.mxu0
    %154 = vmatprep.subr.bf16.mxu0 0
    %155 = vmatpush1.bf16.msra.mxu0 %v98
    %156 = vmatprep.subr.bf16.mxu0 0
    %157 = vmatpush1.bf16.msra.mxu0 %v99
    %158 = vmatprep.subr.bf16.mxu0 0
    %159 = vmatpush1.bf16.msra.mxu0 %v100
    %160 = vmatprep.subr.bf16.mxu0 0
    %161 = vmatpush1.bf16.msra.mxu0 %v101
    %162 = vmatprep.subr.bf16.mxu0 0
    %163 = vmatpush1.bf16.msra.mxu0 %v102
    %164 = vmatprep.subr.bf16.mxu0 0
    %165 = vmatpush1.bf16.msra.mxu0 %v103
    %166 = vmatprep.subr.bf16.mxu0 0
    %167 = vmatpush1.bf16.msra.mxu0 %v104
    %168 = vmatprep.subr.bf16.mxu0 0
    %169 = vmatpush1.bf16.msra.mxu0 %v105
    %170 = vmatprep.subr.bf16.mxu0 0
    %171 = vmatpush1.bf16.msra.mxu0 0
    %172 = vmatprep.subr.bf16.mxu0 0
    %173 = vmatpush1.bf16.msra.mxu0 0
    %174 = vmatprep.subr.bf16.mxu0 0
    %175 = vmatpush1.bf16.msra.mxu0 0
    %176 = vmatprep.subr.bf16.mxu0 0
    %177 = vmatpush1.bf16.msra.mxu0 0
    %178 = vmatprep.subr.bf16.mxu0 0
    %179 = vmatpush1.bf16.msra.mxu0 0
    %180 = vmatprep.subr.bf16.mxu0 0
    %181 = vmatpush1.bf16.msra.mxu0 0
    %182 = vmatprep.subr.bf16.mxu0 0
    %183 = vmatpush1.bf16.msra.mxu0 0
    %184 = vmatprep.subr.bf16.mxu0 0
    %185 = vmatpush1.bf16.msra.mxu0 0
    %186 = vmatprep.mubr.bf16.mxu0 0
    %187 = vmatmul.mubr.bf16.gmra.mrb[0].mxu0 %v62
    %v188 = vpop.f32.mrb[0].mxu0
    %v189 = vadd.f32 %v149, %v188
    %v190 = vpop.f32.mrb[0].mxu0
    %v191 = vpop.f32.mrb[0].mxu0
    %v192 = vpop.f32.mrb[0].mxu0
    %193 = vdwg.mxu0
    %v194 = vmul.f32 %v189, 0.03125
    %v195 = vsub.f32 %v45, %v194
    %v196 = vmul.f32 %v195, %v195
    %v197 = vpack.c.bf16 %v196, %v196
    %v198 = vunpack.c.l.bf16 %v197
    %v199 = vsub.f32 %v196, %v198
    %v200 = vpack.c.bf16 %v199, %v199
    %201 = vmatprep.subr.bf16.mxu0 0
    %202 = vmatpush1.bf16.msra.mxu0 %v98
    %203 = vmatprep.subr.bf16.mxu0 0
    %204 = vmatpush1.bf16.msra.mxu0 %v99
    %205 = vmatprep.subr.bf16.mxu0 0
    %206 = vmatpush1.bf16.msra.mxu0 %v100
    %207 = vmatprep.subr.bf16.mxu0 0
    %208 = vmatpush1.bf16.msra.mxu0 %v101
    %209 = vmatprep.subr.bf16.mxu0 0
    %210 = vmatpush1.bf16.msra.mxu0 %v102
    %211 = vmatprep.subr.bf16.mxu0 0
    %212 = vmatpush1.bf16.msra.mxu0 %v103
    %213 = vmatprep.subr.bf16.mxu0 0
    %214 = vmatpush1.bf16.msra.mxu0 %v104
    %215 = vmatprep.subr.bf16.mxu0 0
    %216 = vmatpush1.bf16.msra.mxu0 %v105
    %217 = vmatprep.subr.bf16.mxu0 0
    %218 = vmatpush1.bf16.msra.mxu0 0
    %219 = vmatprep.subr.bf16.mxu0 0
    %220 = vmatpush1.bf16.msra.mxu0 0
    %221 = vmatprep.subr.bf16.mxu0 0
    %222 = vmatpush1.bf16.msra.mxu0 0
    %223 = vmatprep.subr.bf16.mxu0 0
    %224 = vmatpush1.bf16.msra.mxu0 0
    %225 = vmatprep.subr.bf16.mxu0 0
    %226 = vmatpush1.bf16.msra.mxu0 0
    %227 = vmatprep.subr.bf16.mxu0 0
    %228 = vmatpush1.bf16.msra.mxu0 0
    %229 = vmatprep.subr.bf16.mxu0 0
    %230 = vmatpush1.bf16.msra.mxu0 0
    %231 = vmatprep.subr.bf16.mxu0 0
    %232 = vmatpush1.bf16.msra.mxu0 0
    %233 = vmatprep.mubr.bf16.mxu0 0
    %234 = vmatmul.mubr.bf16.gmra.mrb[0].mxu0 %v200
    %v235 = vpop.f32.mrb[0].mxu0
    %v236 = vadd.f32 0.0, %v235
    %v237 = vpop.f32.mrb[0].mxu0
    %v238 = vpop.f32.mrb[0].mxu0
    %v239 = vpop.f32.mrb[0].mxu0
    %240 = vdwg.mxu0
    %241 = vmatprep.subr.bf16.mxu0 0
    %242 = vmatpush1.bf16.msra.mxu0 %v98
    %243 = vmatprep.subr.bf16.mxu0 0
    %244 = vmatpush1.bf16.msra.mxu0 %v99
    %245 = vmatprep.subr.bf16.mxu0 0
    %246 = vmatpush1.bf16.msra.mxu0 %v100
    %247 = vmatprep.subr.bf16.mxu0 0
    %248 = vmatpush1.bf16.msra.mxu0 %v101
    %249 = vmatprep.subr.bf16.mxu0 0
    %250 = vmatpush1.bf16.msra.mxu0 %v102
    %251 = vmatprep.subr.bf16.mxu0 0
    %252 = vmatpush1.bf16.msra.mxu0 %v103
    %253 = vmatprep.subr.bf16.mxu0 0
    %254 = vmatpush1.bf16.msra.mxu0 %v104
    %255 = vmatprep.subr.bf16.mxu0 0
    %256 = vmatpush1.bf16.msra.mxu0 %v105
    %257 = vmatprep.subr.bf16.mxu0 0
    %258 = vmatpush1.bf16.msra.mxu0 0
    %259 = vmatprep.subr.bf16.mxu0 0
    %260 = vmatpush1.bf16.msra.mxu0 0
    %261 = vmatprep.subr.bf16.mxu0 0
    %262 = vmatpush1.bf16.msra.mxu0 0
    %263 = vmatprep.subr.bf16.mxu0 0
    %264 = vmatpush1.bf16.msra.mxu0 0
    %265 = vmatprep.subr.bf16.mxu0 0
    %266 = vmatpush1.bf16.msra.mxu0 0
    %267 = vmatprep.subr.bf16.mxu0 0
    %268 = vmatpush1.bf16.msra.mxu0 0
    %269 = vmatprep.subr.bf16.mxu0 0
    %270 = vmatpush1.bf16.msra.mxu0 0
    %271 = vmatprep.subr.bf16.mxu0 0
    %272 = vmatpush1.bf16.msra.mxu0 0
    %273 = vmatprep.mubr.bf16.mxu0 0
    %274 = vmatmul.mubr.bf16.gmra.mrb[0].mxu0 %v197
    %v275 = vpop.f32.mrb[0].mxu0
    %v276 = vadd.f32 %v236, %v275
    %v277 = vpop.f32.mrb[0].mxu0
    %v278 = vpop.f32.mrb[0].mxu0
    %v279 = vpop.f32.mrb[0].mxu0
    %280 = vdwg.mxu0
    %v281 = vmul.f32 %v276, 0.03125
    %v282 = vadd.f32 %v281, 1e-12
    %v283 = vrsqrt.pop %v282
    %v284 = vmul.f32 %v195, %v283
    %v285 = vld [vmem:[%s1] sm:$0x1]
    %v287 = vlaneseq
    %v288 = vshrl.u32 %v287, 7
    %v289 = vsub.s32 0, %v288
    %v290 = vrot.slane %v285, %v289
    %v292 = vmul.f32 %v284, %v290
    %v293 = vld [vmem:[%s2] sm:$0x1]
    %v295 = vlaneseq
    %v296 = vshrl.u32 %v295, 7
    %v297 = vsub.s32 0, %v296
    %v298 = vrot.slane %v293, %v297
    %v300 = vadd.f32 %v292, %v298
    %301 = vst [vmem:[#allocation7] sm:$0xf] %v300
    // Predicated region
    $region26: #{tpu_custom_call.1} parent=1 // pred_check
      _
    $region27: #{tpu_custom_call.1} parent=1 // pred_check_branch
      %303 = sbr.rel (0) target = $region29
    $region28: #{tpu_custom_call.1} parent=1 // pred_region
      %s305 = ssub.s32 64, 64
      %306 = vsyncadd [#allocation4], %s305
      %s308 = sshll.u32 [#allocation7], 4
      %s309 = int_to_ptr.vmem [resolvable:$true] %s308
      %311 = dma.vmem_to_hbm [thread:$0]  %s309, 64, %s4, [#allocation4]
    $region29: #{tpu_custom_call.1} parent=1 // pred_fallthru
      _
    // Predicated region
    $region30: #{tpu_custom_call.1} parent=1 // pred_check
      _
    $region31: #{tpu_custom_call.1} parent=1 // pred_check_branch
      %313 = sbr.rel (0) target = $region33
    $region32: #{tpu_custom_call.1} parent=1 // pred_region
      %314 = dma.done [#allocation4], 64
    $region33: #{tpu_custom_call.1} parent=1 // pred_fallthru
      _
    %315 = vsyncpa [#allocation3], 1
    %316 = vsyncpa [#allocation6], 1
    %317 = vsyncpa [#allocation4], 1

</llo_original>
